<compile_context>
chip_gen: v6e
topology: v6e:2x2x1
jax: 0.10.0
libtpu: 0.0.40
codegen_flags: <defaults>
</compile_context>

<pallas_src>
import functools
import math

import jax
import jax.numpy as jnp
from jax import lax
from jax.experimental import pallas as pl
from jax.experimental.pallas import tpu as pltpu


# --------------------------- linear: x @ w + b (+ReLU) -----------------------

def _linear_kernel(x_ref, w_ref, b_ref, o_ref, acc_ref, *, activation):
    @pl.when(pl.program_id(2) == 0)
    def _():
        acc_ref[...] = jnp.zeros_like(acc_ref)

    acc_ref[...] += jnp.dot(x_ref[...], w_ref[...],
                            preferred_element_type=jnp.float32)

    @pl.when(pl.program_id(2) == pl.num_programs(2) - 1)
    def _():
        r = acc_ref[...] + b_ref[...]          # (tm, tn) + (1, tn)
        if activation == "relu":
            r = jnp.maximum(r, 0.0)
        o_ref[...] = r.astype(o_ref.dtype)


def linear(x, w, b, activation=None, tm=256, tn=1024, tk=1024):
    """x: [M, K] @ w: [K, N] + b: [N], optionally fused ReLU."""
    M, K = x.shape
    K2, N = w.shape
    assert K == K2 and b.shape == (N,)
    tm, tn, tk = min(tm, M), min(tn, N), min(tk, K)
    assert M % tm == 0 and N % tn == 0 and K % tk == 0

    return pl.pallas_call(
        functools.partial(_linear_kernel, activation=activation),
        out_shape=jax.ShapeDtypeStruct((M, N), x.dtype),
        grid_spec=pltpu.PrefetchScalarGridSpec(
            num_scalar_prefetch=0,
            grid=(M // tm, N // tn, K // tk),
            in_specs=[
                pl.BlockSpec((tm, tk), lambda i, j, k: (i, k)),
                pl.BlockSpec((tk, tn), lambda i, j, k: (k, j)),
                pl.BlockSpec((1, tn), lambda i, j, k: (0, j)),
            ],
            out_specs=pl.BlockSpec((tm, tn), lambda i, j, k: (i, j)),
            scratch_shapes=[pltpu.VMEM((tm, tn), jnp.float32)],
        ),
        compiler_params=pltpu.CompilerParams(
            dimension_semantics=("parallel", "parallel", "arbitrary")),
    )(x, w, b.reshape(1, N))


# ----------------------- (residual +) LayerNorm(last dim) --------------------

def _layernorm_kernel(x_ref, g_ref, b_ref, o_ref, *, eps):
    x = x_ref[...].astype(jnp.float32)
    mu = jnp.mean(x, axis=-1, keepdims=True)
    xc = x - mu
    var = jnp.mean(xc * xc, axis=-1, keepdims=True)
    y = xc * lax.rsqrt(var + eps) * g_ref[...] + b_ref[...]
    o_ref[...] = y.astype(o_ref.dtype)


def _add_layernorm_kernel(x_ref, r_ref, g_ref, b_ref, o_ref, *, eps):
    x = x_ref[...].astype(jnp.float32) + r_ref[...].astype(jnp.float32)
    mu = jnp.mean(x, axis=-1, keepdims=True)
    xc = x - mu
    var = jnp.mean(xc * xc, axis=-1, keepdims=True)
    y = xc * lax.rsqrt(var + eps) * g_ref[...] + b_ref[...]
    o_ref[...] = y.astype(o_ref.dtype)


def layernorm(x, gamma, beta, residual=None, eps=1e-5, tm=256):
    """LayerNorm over last dim of x [M, D]; optionally fuses (x + residual)."""
    M, D = x.shape
    tm = min(tm, M)
    assert M % tm == 0
    row_spec = pl.BlockSpec((tm, D), lambda i: (i, 0))
    vec_spec = pl.BlockSpec((1, D), lambda i: (0, 0))
    g2, b2 = gamma.reshape(1, D), beta.reshape(1, D)

    if residual is None:
        kern = functools.partial(_layernorm_kernel, eps=eps)
        in_specs = [row_spec, vec_spec, vec_spec]
        args = (x, g2, b2)
    else:
        kern = functools.partial(_add_layernorm_kernel, eps=eps)
        in_specs = [row_spec, row_spec, vec_spec, vec_spec]
        args = (x, residual, g2, b2)

    return pl.pallas_call(
        kern,
        out_shape=jax.ShapeDtypeStruct((M, D), x.dtype),
        grid_spec=pltpu.PrefetchScalarGridSpec(
            num_scalar_prefetch=0,
            grid=(M // tm,),
            in_specs=in_specs,
            out_specs=row_spec,
        ),
        compiler_params=pltpu.CompilerParams(
            dimension_semantics=("parallel",)),
    )(*args)


# ---------------------- batched softmax attention (small L) ------------------

def _attention_kernel(q_ref, k_ref, v_ref, o_ref, *, scale):
    q = q_ref[...].astype(jnp.float32)
    k = k_ref[...].astype(jnp.float32)
    v = v_ref[...].astype(jnp.float32)
    s = jnp.einsum("bqd,bkd->bqk", q, k,
                   preferred_element_type=jnp.float32) * scale
    m = jnp.max(s, axis=-1, keepdims=True)
    p = jnp.exp(s - m)
    p = p / jnp.sum(p, axis=-1, keepdims=True)
    o = jnp.einsum("bqk,bkd->bqd", p, v, preferred_element_type=jnp.float32)
    o_ref[...] = o.astype(o_ref.dtype)


def attention(q, k, v):
    """q, k, v: [B*H, L, dh] -> [B*H, L, dh], full softmax attention."""
    BH, L, dh = q.shape
    scale = 1.0 / math.sqrt(dh)
    spec = pl.BlockSpec((BH, L, dh), lambda i: (0, 0, 0))
    return pl.pallas_call(
        functools.partial(_attention_kernel, scale=scale),
        out_shape=jax.ShapeDtypeStruct((BH, L, dh), q.dtype),
        grid_spec=pltpu.PrefetchScalarGridSpec(
            num_scalar_prefetch=0,
            grid=(1,),
            in_specs=[spec, spec, spec],
            out_specs=spec,
        ),
        compiler_params=pltpu.CompilerParams(
            dimension_semantics=("arbitrary",)),
    )(q, k, v)


# ------------------------------- Encoder1 forward ----------------------------

def encoder1_forward(x, params, *, nhead, eps=1e-5):
    """x: [B, L, D] -> [B, L, D]; matches Encoder1.forward (dropout=0)."""
    B, L, D = x.shape
    dh = D // nhead
    N = B * L

    def split_heads(t):   # [N, D] -> [B*H, L, dh]
        return (t.reshape(B, L, nhead, dh)
                 .transpose(0, 2, 1, 3)
                 .reshape(B * nhead, L, dh))

    def merge_heads(t):   # [B*H, L, dh] -> [N, D]
        return (t.reshape(B, nhead, L, dh)
                 .transpose(0, 2, 1, 3)
                 .reshape(N, D))

    # Encoder1: output = encoder(norm(x))
    y = layernorm(x.reshape(N, D), params["g0"], params["b0"], eps=eps)

    for lp in params["layers"]:
        # ---- self-attention block, post-norm:  y = LN1(y + SA(y)) ----
        qkv = linear(y, lp["w_qkv"], lp["b_qkv"])                     # [N, 3D]
        q, k, v = jnp.split(qkv, 3, axis=-1)
        o = attention(split_heads(q), split_heads(k), split_heads(v))
        attn = linear(merge_heads(o), lp["w_out"], lp["b_out"])       # [N, D]
        y = layernorm(attn, lp["g1"], lp["b1"], residual=y, eps=eps)

        # ---- feed-forward block, post-norm:  y = LN2(y + FFN(y)) ----
        h = linear(y, lp["w_ff1"], lp["b_ff1"], activation="relu")    # [N, F]
        ff = linear(h, lp["w_ff2"], lp["b_ff2"])                      # [N, D]
        y = layernorm(ff, lp["g2"], lp["b2"], residual=y, eps=eps)

    return y.reshape(B, L, D)


# ------------------------------ plain-JAX reference --------------------------

def _ref_ln(x, g, b, eps):
    mu = jnp.mean(x, axis=-1, keepdims=True)
    var = jnp.mean((x - mu) ** 2, axis=-1, keepdims=True)
    return (x - mu) * lax.rsqrt(var + eps) * g + b


def encoder1_reference(x, params, *, nhead, eps=1e-5):
    B, L, D = x.shape
    dh = D // nhead
    N = B * L
    hp = jax.lax.Precision.HIGHEST
    y = _ref_ln(x.reshape(N, D), params["g0"], params["b0"], eps)
    for lp in params["layers"]:
        qkv = jnp.dot(y, lp["w_qkv"], precision=hp) + lp["b_qkv"]
        q, k, v = jnp.split(qkv, 3, axis=-1)

        def heads(t):
            return t.reshape(B, L, nhead, dh).transpose(0, 2, 1, 3)

        qh, kh, vh = heads(q), heads(k), heads(v)
        s = jnp.einsum("bhqd,bhkd->bhqk", qh, kh, precision=hp) / math.sqrt(dh)
        p = jax.nn.softmax(s, axis=-1)
        o = jnp.einsum("bhqk,bhkd->bhqd", p, vh, precision=hp)
        o = o.transpose(0, 2, 1, 3).reshape(N, D)
        attn = jnp.dot(o, lp["w_out"], precision=hp) + lp["b_out"]
        y = _ref_ln(y + attn, lp["g1"], lp["b1"], eps)
        h = jnp.maximum(jnp.dot(y, lp["w_ff1"], precision=hp) + lp["b_ff1"], 0.0)
        ff = jnp.dot(h, lp["w_ff2"], precision=hp) + lp["b_ff2"]
        y = _ref_ln(y + ff, lp["g2"], lp["b2"], eps)
    return y.reshape(B, L, D)


# ------------------------------------ demo -----------------------------------

if __name__ == "__main__":
    D_MODEL, NHEAD, DIM_FFN, NUM_LAYERS, EPS = 2048, 32, 2048 * 4, 20, 1e-5
    B, L = 2, 8
    assert D_MODEL % NHEAD == 0

    key = jax.random.PRNGKey(0)
    key, kx, kg = jax.random.split(key, 3)

    def init_layer(k):
        ks = jax.random.split(k, 12)
        s_in = 1.0 / math.sqrt(D_MODEL)
        s_ff = 1.0 / math.sqrt(DIM_FFN)
        f32 = jnp.float32
        return {
            "w_qkv": jax.random.normal(ks[0], (D_MODEL, 3 * D_MODEL), f32) * s_in,
            "b_qkv": jax.random.normal(ks[1], (3 * D_MODEL,), f32) * 0.02,
            "w_out": jax.random.normal(ks[2], (D_MODEL, D_MODEL), f32) * s_in,
            "b_out": jax.random.normal(ks[3], (D_MODEL,), f32) * 0.02,
            "g1": 1.0 + 0.1 * jax.random.normal(ks[4], (D_MODEL,), f32),
            "b1": 0.1 * jax.random.normal(ks[5], (D_MODEL,), f32),
            "w_ff1": jax.random.normal(ks[6], (D_MODEL, DIM_FFN), f32) * s_in,
            "b_ff1": jax.random.normal(ks[7], (DIM_FFN,), f32) * 0.02,
            "w_ff2": jax.random.normal(ks[8], (DIM_FFN, D_MODEL), f32) * s_ff,
            "b_ff2": jax.random.normal(ks[9], (D_MODEL,), f32) * 0.02,
            "g2": 1.0 + 0.1 * jax.random.normal(ks[10], (D_MODEL,), f32),
            "b2": 0.1 * jax.random.normal(ks[11], (D_MODEL,), f32),
        }

    layer_keys = jax.random.split(kg, NUM_LAYERS)
    key, k0a, k0b = jax.random.split(key, 3)
    params = {
        "g0": 1.0 + 0.1 * jax.random.normal(k0a, (D_MODEL,), jnp.float32),
        "b0": 0.1 * jax.random.normal(k0b, (D_MODEL,), jnp.float32),
        "layers": [init_layer(k) for k in layer_keys],
    }
    x = jax.random.normal(kx, (B, L, D_MODEL), jnp.float32)

    out = encoder1_forward(x, params, nhead=NHEAD, eps=EPS)
    out = jax.block_until_ready(out)
    assert out.shape == (B, L, D_MODEL)
    assert bool(jnp.all(jnp.isfinite(out)))

    ref = jax.block_until_ready(encoder1_reference(x, params, nhead=NHEAD, eps=EPS))
    max_err = float(jnp.max(jnp.abs(out - ref)))
    assert max_err < 2e-2, f"mismatch vs reference: max_err={max_err}"

    print("KERNEL_OK")
</pallas_src>

<mosaic_0001>
module attributes {stable_mosaic.version = 11 : i64} {
  func.func @_layernorm_kernel(%arg0: i32, %arg1: memref<16x2048xf32, #tpu.memory_space<vmem>>, %arg2: memref<1x2048xf32, #tpu.memory_space<vmem>>, %arg3: memref<1x2048xf32, #tpu.memory_space<vmem>>, %arg4: memref<16x2048xf32, #tpu.memory_space<vmem>>) attributes {dimension_semantics = [#tpu.dimension_semantics<parallel>], iteration_bounds = array<i64: 1>, scalar_prefetch = 0 : i64, scratch_operands = 0 : i64, tpu.core_type = #tpu.core_type<tc>, window_params = [{transform_indices = @transform_0, window_bounds = array<i64: 16, 2048>}, {pipeline_mode = #tpu.pipeline_mode<synchronous>, transform_indices = @transform_1, window_bounds = array<i64: 1, 2048>}, {pipeline_mode = #tpu.pipeline_mode<synchronous>, transform_indices = @transform_2, window_bounds = array<i64: 1, 2048>}, {transform_indices = @transform_3, window_bounds = array<i64: 16, 2048>}]} {
    %c0 = arith.constant 0 : index
    %c0_0 = arith.constant 0 : index
    %0 = vector.load %arg1[%c0, %c0_0] : memref<16x2048xf32, #tpu.memory_space<vmem>>, vector<16x2048xf32>
    %cst = arith.constant dense<0.000000e+00> : vector<16xf32>
    %1 = vector.multi_reduction <add>, %0, %cst [1] : vector<16x2048xf32> to vector<16xf32>
    %2 = vector.shape_cast %1 : vector<16xf32> to vector<16x1xf32>
    %cst_1 = arith.constant 2.048000e+03 : f32
    %3 = vector.broadcast %cst_1 : f32 to vector<16x1xf32>
    %4 = arith.divf %2, %3 : vector<16x1xf32>
    %5 = vector.broadcast %4 : vector<16x1xf32> to vector<16x2048xf32>
    %6 = arith.subf %0, %5 : vector<16x2048xf32>
    %7 = arith.mulf %6, %6 : vector<16x2048xf32>
    %cst_2 = arith.constant dense<0.000000e+00> : vector<16xf32>
    %8 = vector.multi_reduction <add>, %7, %cst_2 [1] : vector<16x2048xf32> to vector<16xf32>
    %9 = vector.shape_cast %8 : vector<16xf32> to vector<16x1xf32>
    %cst_3 = arith.constant 2.048000e+03 : f32
    %10 = vector.broadcast %cst_3 : f32 to vector<16x1xf32>
    %11 = arith.divf %9, %10 : vector<16x1xf32>
    %cst_4 = arith.constant 9.99999974E-6 : f32
    %12 = vector.broadcast %cst_4 : f32 to vector<16x1xf32>
    %13 = arith.addf %11, %12 : vector<16x1xf32>
    %14 = math.rsqrt %13 : vector<16x1xf32>
    %15 = vector.broadcast %14 : vector<16x1xf32> to vector<16x2048xf32>
    %16 = arith.mulf %6, %15 : vector<16x2048xf32>
    %c0_5 = arith.constant 0 : index
    %c0_6 = arith.constant 0 : index
    %17 = vector.load %arg2[%c0_5, %c0_6] : memref<1x2048xf32, #tpu.memory_space<vmem>>, vector<1x2048xf32>
    %18 = vector.broadcast %17 : vector<1x2048xf32> to vector<16x2048xf32>
    %19 = arith.mulf %16, %18 : vector<16x2048xf32>
    %c0_7 = arith.constant 0 : index
    %c0_8 = arith.constant 0 : index
    %20 = vector.load %arg3[%c0_7, %c0_8] : memref<1x2048xf32, #tpu.memory_space<vmem>>, vector<1x2048xf32>
    %21 = vector.broadcast %20 : vector<1x2048xf32> to vector<16x2048xf32>
    %22 = arith.addf %19, %21 : vector<16x2048xf32>
    %c0_9 = arith.constant 0 : index
    %c0_10 = arith.constant 0 : index
    %23 = vector.load %arg4[%c0_9, %c0_10] : memref<16x2048xf32, #tpu.memory_space<vmem>>, vector<16x2048xf32>
    tpu.vector_store %arg4[%c0_9, %c0_10], %22 {strides = array<i32>} : memref<16x2048xf32, #tpu.memory_space<vmem>>, vector<16x2048xf32>,
    return
  }
  func.func @transform_0(%arg0: i32) -> (i32, i32) {
    %c0_i32 = arith.constant 0 : i32
    %c0_i32_0 = arith.constant 0 : i32
    return %arg0, %c0_i32 : i32, i32
  }
  func.func @transform_1(%arg0: i32) -> (i32, i32) {
    %c0_i32 = arith.constant 0 : i32
    %c0_i32_0 = arith.constant 0 : i32
    %c0_i32_1 = arith.constant 0 : i32
    return %c0_i32, %c0_i32_0 : i32, i32
  }
  func.func @transform_2(%arg0: i32) -> (i32, i32) {
    %c0_i32 = arith.constant 0 : i32
    %c0_i32_0 = arith.constant 0 : i32
    %c0_i32_1 = arith.constant 0 : i32
    return %c0_i32, %c0_i32_0 : i32, i32
  }
  func.func @transform_3(%arg0: i32) -> (i32, i32) {
    %c0_i32 = arith.constant 0 : i32
    %c0_i32_0 = arith.constant 0 : i32
    return %arg0, %c0_i32 : i32, i32
  }
}

</mosaic_0001>

<llo_original>
// kernel: tpu_custom_call.1
$region0: #{tpu_custom_call.1}
  #allocation0 [shape = 'u32[]', space=smem, size = 0x4, offset = 0x4, fixed_abs, tag = 'smem constant byte address 0x4 - core index']
  #allocation1 [shape = 'u32[144,128]{1,0:T(1,128)}', space=vmem, size = 0x12000, scoped, tag = 'internal scratch']
  %s0 = inlined_call_operand.hbm [shape: f32[16,2048], index: 0, kind: input, shape index: {}]
  %s1 = inlined_call_operand.hbm [shape: f32[1,2048], index: 1, kind: input, shape index: {}]
  %s2 = inlined_call_operand.hbm [shape: f32[1,2048], index: 2, kind: input, shape index: {}]
  %s3 = inlined_call_operand.hbm [shape: f32[16,2048], index: 3, kind: output, shape index: {}]
  %s4 = sld [smem:[#allocation0]]
  $region34: #{tpu_custom_call.1} parent=0
    _
  %s6 = ssub.s32 1, %s4
  %s7 = scalar_select 0, %s6, %s4
  $region1: #{tpu_custom_call.1} parent=0
    #allocation2 [shape = 'u8[131072]{0}', space=vmem, size = 0x20000, scoped, tag = 'input window, operand 0, single buffered']
    #allocation3 [shape = 's32[1]{0}', space=sflag, size = 0x4, scoped, tag = 'scoped memory for tpu_custom_call.1']
    #allocation4 [shape = 's32[1]{0}', space=sflag, size = 0x4, scoped, tag = 'scoped memory for tpu_custom_call.1']
    #allocation5 [shape = 'u8[8192]{0}', space=vmem, size = 0x2000, scoped, tag = 'input window, operand 1, single buffered']
    #allocation6 [shape = 's32[1]{0}', space=sflag, size = 0x4, scoped, tag = 'scoped memory for tpu_custom_call.1']
    #allocation7 [shape = 'u8[8192]{0}', space=vmem, size = 0x2000, scoped, tag = 'input window, operand 2, single buffered']
    #allocation8 [shape = 'u8[131072]{0}', space=vmem, size = 0x20000, scoped, tag = 'output window, operand 0, single buffered']
    %8 = vsyncpa [#allocation3], 0
    %9 = vsyncpa [#allocation6], 0
    %10 = vsyncpa [#allocation4], 0
    // Predicated region
    $region2: #{tpu_custom_call.1} parent=1 // pred_check
      _
    $region3: #{tpu_custom_call.1} parent=1 // pred_check_branch
      %12 = sbr.rel (0) target = $region5
    $region4: #{tpu_custom_call.1} parent=1 // pred_region
      %s14 = ssub.s32 4096, 4096
      %15 = vsyncadd [#allocation3], %s14
      %s16 = sshll.u32 [#allocation2], 4
      %s17 = int_to_ptr.vmem [resolvable:$true] %s16
      %22 = dma.hbm_to_vmem [thread:$0]  %s0, 4096, %s17, [#allocation3], 2048, 2048, 128
    $region5: #{tpu_custom_call.1} parent=1 // pred_fallthru
      _
    // Predicated region
    $region6: #{tpu_custom_call.1} parent=1 // pred_check
      _
    $region7: #{tpu_custom_call.1} parent=1 // pred_check_branch
      %24 = sbr.rel (0) target = $region9
    $region8: #{tpu_custom_call.1} parent=1 // pred_region
      %s26 = ssub.s32 256, 256
      %27 = vsyncadd [#allocation6], %s26
      %s29 = sshll.u32 [#allocation5], 4
      %s30 = int_to_ptr.vmem [resolvable:$true] %s29
      %32 = dma.hbm_to_vmem [thread:$0]  %s1, 256, %s30, [#allocation6]
    $region9: #{tpu_custom_call.1} parent=1 // pred_fallthru
      _
    // Predicated region
    $region10: #{tpu_custom_call.1} parent=1 // pred_check
      _
    $region11: #{tpu_custom_call.1} parent=1 // pred_check_branch
      %34 = sbr.rel (0) target = $region13
    $region12: #{tpu_custom_call.1} parent=1 // pred_region
      %s36 = ssub.s32 256, 256
      %37 = vsyncadd [#allocation6], %s36
      %s39 = sshll.u32 [#allocation7], 4
      %s40 = int_to_ptr.vmem [resolvable:$true] %s39
      %42 = dma.hbm_to_vmem [thread:$0]  %s2, 256, %s40, [#allocation6]
    $region13: #{tpu_custom_call.1} parent=1 // pred_fallthru
      _
    // Predicated region
    $region14: #{tpu_custom_call.1} parent=1 // pred_check
      _
    $region15: #{tpu_custom_call.1} parent=1 // pred_check_branch
      %44 = sbr.rel (0) target = $region17
    $region16: #{tpu_custom_call.1} parent=1 // pred_region
      %45 = dma.done [#allocation3], 4096
    $region17: #{tpu_custom_call.1} parent=1 // pred_fallthru
      _
    // Predicated region
    $region18: #{tpu_custom_call.1} parent=1 // pred_check
      _
    $region19: #{tpu_custom_call.1} parent=1 // pred_check_branch
      %47 = sbr.rel (0) target = $region21
    $region20: #{tpu_custom_call.1} parent=1 // pred_region
      %48 = dma.done [#allocation6], 256
    $region21: #{tpu_custom_call.1} parent=1 // pred_fallthru
      _
    // Predicated region
    $region22: #{tpu_custom_call.1} parent=1 // pred_check
      _
    $region23: #{tpu_custom_call.1} parent=1 // pred_check_branch
      %50 = sbr.rel (0) target = $region25
    $region24: #{tpu_custom_call.1} parent=1 // pred_region
      %51 = dma.done [#allocation6], 256
    $region25: #{tpu_custom_call.1} parent=1 // pred_fallthru
      _
    %v52 = vld [vmem:[#allocation2] sm:$0xff]
    %v53 = vld [vmem:[#allocation2 + $0x8] sm:$0xff]
    %v54 = vld [vmem:[#allocation2 + $0x10] sm:$0xff]
    %v55 = vld [vmem:[#allocation2 + $0x18] sm:$0xff]
    %v56 = vld [vmem:[#allocation2 + $0x20] sm:$0xff]
    %v57 = vld [vmem:[#allocation2 + $0x28] sm:$0xff]
    %v58 = vld [vmem:[#allocation2 + $0x30] sm:$0xff]
    %v59 = vld [vmem:[#allocation2 + $0x38] sm:$0xff]
    %v60 = vld [vmem:[#allocation2 + $0x40] sm:$0xff]
    %v61 = vld [vmem:[#allocation2 + $0x48] sm:$0xff]
    %v62 = vld [vmem:[#allocation2 + $0x50] sm:$0xff]
    %v63 = vld [vmem:[#allocation2 + $0x58] sm:$0xff]
    %v64 = vld [vmem:[#allocation2 + $0x60] sm:$0xff]
    %v65 = vld [vmem:[#allocation2 + $0x68] sm:$0xff]
    %v66 = vld [vmem:[#allocation2 + $0x70] sm:$0xff]
    %v67 = vld [vmem:[#allocation2 + $0x78] sm:$0xff]
    %v68 = vld [vmem:[#allocation2 + $0x80] sm:$0xff]
    %v69 = vld [vmem:[#allocation2 + $0x88] sm:$0xff]
    %v70 = vld [vmem:[#allocation2 + $0x90] sm:$0xff]
    %v71 = vld [vmem:[#allocation2 + $0x98] sm:$0xff]
    %v72 = vld [vmem:[#allocation2 + $0xa0] sm:$0xff]
    %v73 = vld [vmem:[#allocation2 + $0xa8] sm:$0xff]
    %v74 = vld [vmem:[#allocation2 + $0xb0] sm:$0xff]
    %v75 = vld [vmem:[#allocation2 + $0xb8] sm:$0xff]
    %v76 = vld [vmem:[#allocation2 + $0xc0] sm:$0xff]
    %v77 = vld [vmem:[#allocation2 + $0xc8] sm:$0xff]
    %v78 = vld [vmem:[#allocation2 + $0xd0] sm:$0xff]
    %v79 = vld [vmem:[#allocation2 + $0xd8] sm:$0xff]
    %v80 = vld [vmem:[#allocation2 + $0xe0] sm:$0xff]
    %v81 = vld [vmem:[#allocation2 + $0xe8] sm:$0xff]
    %v82 = vld [vmem:[#allocation2 + $0xf0] sm:$0xff]
    %v83 = vld [vmem:[#allocation2 + $0xf8] sm:$0xff]
    %v84 = vadd.f32 %v52, %v53
    %v85 = vadd.f32 %v84, %v54
    %v86 = vadd.f32 %v85, %v55
    %v87 = vadd.f32 %v86, %v56
    %v88 = vadd.f32 %v87, %v57
    %v89 = vadd.f32 %v88, %v58
    %v90 = vadd.f32 %v89, %v59
    %v91 = vadd.f32 %v90, %v60
    %v92 = vadd.f32 %v91, %v61
    %v93 = vadd.f32 %v92, %v62
    %v94 = vadd.f32 %v93, %v63
    %v95 = vadd.f32 %v94, %v64
    %v96 = vadd.f32 %v95, %v65
    %v97 = vadd.f32 %v96, %v66
    %v98 = vadd.f32 %v97, %v67
    %99 = vadd.xlane.f32.xlu0 %v98
    %v100 = vpop.xlane.xlu0 %99
    %v101 = vadd.f32 %v68, %v69
    %v102 = vadd.f32 %v101, %v70
    %v103 = vadd.f32 %v102, %v71
    %v104 = vadd.f32 %v103, %v72
    %v105 = vadd.f32 %v104, %v73
    %v106 = vadd.f32 %v105, %v74
    %v107 = vadd.f32 %v106, %v75
    %v108 = vadd.f32 %v107, %v76
    %v109 = vadd.f32 %v108, %v77
    %v110 = vadd.f32 %v109, %v78
    %v111 = vadd.f32 %v110, %v79
    %v112 = vadd.f32 %v111, %v80
    %v113 = vadd.f32 %v112, %v81
    %v114 = vadd.f32 %v113, %v82
    %v115 = vadd.f32 %v114, %v83
    %116 = vadd.xlane.f32.xlu0 %v115
    %v117 = vpop.xlane.xlu0 %116
    %v118 = vrcp.pop 2048.0
    %v119 = vmul.f32 %v100, %v118
    %v120 = vmul.f32 %v117, %v118
    %v121 = vsub.f32 %v52, %v119
    %v122 = vsub.f32 %v53, %v119
    %v123 = vsub.f32 %v54, %v119
    %v124 = vsub.f32 %v55, %v119
    %v125 = vsub.f32 %v56, %v119
    %v126 = vsub.f32 %v57, %v119
    %v127 = vsub.f32 %v58, %v119
    %v128 = vsub.f32 %v59, %v119
    %v129 = vsub.f32 %v60, %v119
    %v130 = vsub.f32 %v61, %v119
    %v131 = vsub.f32 %v62, %v119
    %v132 = vsub.f32 %v63, %v119
    %v133 = vsub.f32 %v64, %v119
    %v134 = vsub.f32 %v65, %v119
    %v135 = vsub.f32 %v66, %v119
    %v136 = vsub.f32 %v67, %v119
    %v137 = vsub.f32 %v68, %v120
    %v138 = vsub.f32 %v69, %v120
    %v139 = vsub.f32 %v70, %v120
    %v140 = vsub.f32 %v71, %v120
    %v141 = vsub.f32 %v72, %v120
    %v142 = vsub.f32 %v73, %v120
    %v143 = vsub.f32 %v74, %v120
    %v144 = vsub.f32 %v75, %v120
    %v145 = vsub.f32 %v76, %v120
    %v146 = vsub.f32 %v77, %v120
    %v147 = vsub.f32 %v78, %v120
    %v148 = vsub.f32 %v79, %v120
    %v149 = vsub.f32 %v80, %v120
    %v150 = vsub.f32 %v81, %v120
    %v151 = vsub.f32 %v82, %v120
    %v152 = vsub.f32 %v83, %v120
    %v153 = vmul.f32 %v121, %v121
    %v154 = vmul.f32 %v122, %v122
    %v155 = vmul.f32 %v123, %v123
    %v156 = vmul.f32 %v124, %v124
    %v157 = vmul.f32 %v125, %v125
    %v158 = vmul.f32 %v126, %v126
    %v159 = vmul.f32 %v127, %v127
    %v160 = vmul.f32 %v128, %v128
    %v161 = vmul.f32 %v129, %v129
    %v162 = vmul.f32 %v130, %v130
    %v163 = vmul.f32 %v131, %v131
    %v164 = vmul.f32 %v132, %v132
    %v165 = vmul.f32 %v133, %v133
    %v166 = vmul.f32 %v134, %v134
    %v167 = vmul.f32 %v135, %v135
    %v168 = vmul.f32 %v136, %v136
    %v169 = vmul.f32 %v137, %v137
    %v170 = vmul.f32 %v138, %v138
    %v171 = vmul.f32 %v139, %v139
    %v172 = vmul.f32 %v140, %v140
    %v173 = vmul.f32 %v141, %v141
    %v174 = vmul.f32 %v142, %v142
    %v175 = vmul.f32 %v143, %v143
    %v176 = vmul.f32 %v144, %v144
    %v177 = vmul.f32 %v145, %v145
    %v178 = vmul.f32 %v146, %v146
    %v179 = vmul.f32 %v147, %v147
    %v180 = vmul.f32 %v148, %v148
    %v181 = vmul.f32 %v149, %v149
    %v182 = vmul.f32 %v150, %v150
    %v183 = vmul.f32 %v151, %v151
    %v184 = vmul.f32 %v152, %v152
    %v185 = vadd.f32 %v153, %v154
    %v186 = vadd.f32 %v185, %v155
    %v187 = vadd.f32 %v186, %v156
    %v188 = vadd.f32 %v187, %v157
    %v189 = vadd.f32 %v188, %v158
    %v190 = vadd.f32 %v189, %v159
    %v191 = vadd.f32 %v190, %v160
    %v192 = vadd.f32 %v191, %v161
    %v193 = vadd.f32 %v192, %v162
    %v194 = vadd.f32 %v193, %v163
    %v195 = vadd.f32 %v194, %v164
    %v196 = vadd.f32 %v195, %v165
    %v197 = vadd.f32 %v196, %v166
    %v198 = vadd.f32 %v197, %v167
    %v199 = vadd.f32 %v198, %v168
    %200 = vadd.xlane.f32.xlu0 %v199
    %v201 = vpop.xlane.xlu0 %200
    %v202 = vadd.f32 %v169, %v170
    %v203 = vadd.f32 %v202, %v171
    %v204 = vadd.f32 %v203, %v172
    %v205 = vadd.f32 %v204, %v173
    %v206 = vadd.f32 %v205, %v174
    %v207 = vadd.f32 %v206, %v175
    %v208 = vadd.f32 %v207, %v176
    %v209 = vadd.f32 %v208, %v177
    %v210 = vadd.f32 %v209, %v178
    %v211 = vadd.f32 %v210, %v179
    %v212 = vadd.f32 %v211, %v180
    %v213 = vadd.f32 %v212, %v181
    %v214 = vadd.f32 %v213, %v182
    %v215 = vadd.f32 %v214, %v183
    %v216 = vadd.f32 %v215, %v184
    %217 = vadd.xlane.f32.xlu0 %v216
    %v218 = vpop.xlane.xlu0 %217
    %v219 = vmul.f32 %v201, %v118
    %v220 = vmul.f32 %v218, %v118
    %v221 = vadd.f32 %v219, 1e-05
    %v222 = vadd.f32 %v220, 1e-05
    %v223 = vrsqrt.pop %v221
    %v224 = vrsqrt.pop %v222
    %v225 = vmul.f32 %v121, %v223
    %v226 = vmul.f32 %v122, %v223
    %v227 = vmul.f32 %v123, %v223
    %v228 = vmul.f32 %v124, %v223
    %v229 = vmul.f32 %v125, %v223
    %v230 = vmul.f32 %v126, %v223
    %v231 = vmul.f32 %v127, %v223
    %v232 = vmul.f32 %v128, %v223
    %v233 = vmul.f32 %v129, %v223
    %v234 = vmul.f32 %v130, %v223
    %v235 = vmul.f32 %v131, %v223
    %v236 = vmul.f32 %v132, %v223
    %v237 = vmul.f32 %v133, %v223
    %v238 = vmul.f32 %v134, %v223
    %v239 = vmul.f32 %v135, %v223
    %v240 = vmul.f32 %v136, %v223
    %v241 = vmul.f32 %v137, %v224
    %v242 = vmul.f32 %v138, %v224
    %v243 = vmul.f32 %v139, %v224
    %v244 = vmul.f32 %v140, %v224
    %v245 = vmul.f32 %v141, %v224
    %v246 = vmul.f32 %v142, %v224
    %v247 = vmul.f32 %v143, %v224
    %v248 = vmul.f32 %v144, %v224
    %v249 = vmul.f32 %v145, %v224
    %v250 = vmul.f32 %v146, %v224
    %v251 = vmul.f32 %v147, %v224
    %v252 = vmul.f32 %v148, %v224
    %v253 = vmul.f32 %v149, %v224
    %v254 = vmul.f32 %v150, %v224
    %v255 = vmul.f32 %v151, %v224
    %v256 = vmul.f32 %v152, %v224
    %v257 = vld [vmem:[#allocation5] sm:$0xff]
    %v258 = vld [vmem:[#allocation5 + $0x8] sm:$0xff]
    %v261 = vlaneseq
    %v262 = vshrl.u32 %v261, 7
    %v263 = vsub.s32 0, %v262
    %v264 = vrot.slane %v257, %v263
    %v265 = vlaneseq
    %v266 = vshrl.u32 %v265, 7
    %v267 = vsub.s32 1, %v266
    %v268 = vrot.slane %v257, %v267
    %v269 = vlaneseq
    %v270 = vshrl.u32 %v269, 7
    %v271 = vsub.s32 2, %v270
    %v272 = vrot.slane %v257, %v271
    %v273 = vlaneseq
    %v274 = vshrl.u32 %v273, 7
    %v275 = vsub.s32 3, %v274
    %v276 = vrot.slane %v257, %v275
    %v277 = vlaneseq
    %v278 = vshrl.u32 %v277, 7
    %v279 = vsub.s32 4, %v278
    %v280 = vrot.slane %v257, %v279
    %v281 = vlaneseq
    %v282 = vshrl.u32 %v281, 7
    %v283 = vsub.s32 5, %v282
    %v284 = vrot.slane %v257, %v283
    %v285 = vlaneseq
    %v286 = vshrl.u32 %v285, 7
    %v287 = vsub.s32 6, %v286
    %v288 = vrot.slane %v257, %v287
    %v289 = vlaneseq
    %v290 = vshrl.u32 %v289, 7
    %v291 = vsub.s32 7, %v290
    %v292 = vrot.slane %v257, %v291
    %v293 = vlaneseq
    %v294 = vshrl.u32 %v293, 7
    %v295 = vsub.s32 0, %v294
    %v296 = vrot.slane %v258, %v295
    %v297 = vlaneseq
    %v298 = vshrl.u32 %v297, 7
    %v299 = vsub.s32 1, %v298
    %v300 = vrot.slane %v258, %v299
    %v301 = vlaneseq
    %v302 = vshrl.u32 %v301, 7
    %v303 = vsub.s32 2, %v302
    %v304 = vrot.slane %v258, %v303
    %v305 = vlaneseq
    %v306 = vshrl.u32 %v305, 7
    %v307 = vsub.s32 3, %v306
    %v308 = vrot.slane %v258, %v307
    %v309 = vlaneseq
    %v310 = vshrl.u32 %v309, 7
    %v311 = vsub.s32 4, %v310
    %v312 = vrot.slane %v258, %v311
    %v313 = vlaneseq
    %v314 = vshrl.u32 %v313, 7
    %v315 = vsub.s32 5, %v314
    %v316 = vrot.slane %v258, %v315
    %v317 = vlaneseq
    %v318 = vshrl.u32 %v317, 7
    %v319 = vsub.s32 6, %v318
    %v320 = vrot.slane %v258, %v319
    %v321 = vlaneseq
    %v322 = vshrl.u32 %v321, 7
    %v323 = vsub.s32 7, %v322
    %v324 = vrot.slane %v258, %v323
    %v341 = vmul.f32 %v225, %v264
    %v342 = vmul.f32 %v226, %v268
    %v343 = vmul.f32 %v227, %v272
    %v344 = vmul.f32 %v228, %v276
    %v345 = vmul.f32 %v229, %v280
    %v346 = vmul.f32 %v230, %v284
    %v347 = vmul.f32 %v231, %v288
    %v348 = vmul.f32 %v232, %v292
    %v349 = vmul.f32 %v233, %v296
    %v350 = vmul.f32 %v234, %v300
    %v351 = vmul.f32 %v235, %v304
    %v352 = vmul.f32 %v236, %v308
    %v353 = vmul.f32 %v237, %v312
    %v354 = vmul.f32 %v238, %v316
    %v355 = vmul.f32 %v239, %v320
    %v356 = vmul.f32 %v240, %v324
    %v357 = vmul.f32 %v241, %v264
    %v358 = vmul.f32 %v242, %v268
    %v359 = vmul.f32 %v243, %v272
    %v360 = vmul.f32 %v244, %v276
    %v361 = vmul.f32 %v245, %v280
    %v362 = vmul.f32 %v246, %v284
    %v363 = vmul.f32 %v247, %v288
    %v364 = vmul.f32 %v248, %v292
    %v365 = vmul.f32 %v249, %v296
    %v366 = vmul.f32 %v250, %v300
    %v367 = vmul.f32 %v251, %v304
    %v368 = vmul.f32 %v252, %v308
    %v369 = vmul.f32 %v253, %v312
    %v370 = vmul.f32 %v254, %v316
    %v371 = vmul.f32 %v255, %v320
    %v372 = vmul.f32 %v256, %v324
    %v373 = vld [vmem:[#allocation7] sm:$0xff]
    %v374 = vld [vmem:[#allocation7 + $0x8] sm:$0xff]
    %v377 = vlaneseq
    %v378 = vshrl.u32 %v377, 7
    %v379 = vsub.s32 0, %v378
    %v380 = vrot.slane %v373, %v379
    %v381 = vlaneseq
    %v382 = vshrl.u32 %v381, 7
    %v383 = vsub.s32 1, %v382
    %v384 = vrot.slane %v373, %v383
    %v385 = vlaneseq
    %v386 = vshrl.u32 %v385, 7
    %v387 = vsub.s32 2, %v386
    %v388 = vrot.slane %v373, %v387
    %v389 = vlaneseq
    %v390 = vshrl.u32 %v389, 7
    %v391 = vsub.s32 3, %v390
    %v392 = vrot.slane %v373, %v391
    %v393 = vlaneseq
    %v394 = vshrl.u32 %v393, 7
    %v395 = vsub.s32 4, %v394
    %v396 = vrot.slane %v373, %v395
    %v397 = vlaneseq
    %v398 = vshrl.u32 %v397, 7
    %v399 = vsub.s32 5, %v398
    %v400 = vrot.slane %v373, %v399
    %v401 = vlaneseq
    %v402 = vshrl.u32 %v401, 7
    %v403 = vsub.s32 6, %v402
    %v404 = vrot.slane %v373, %v403
    %v405 = vlaneseq
    %v406 = vshrl.u32 %v405, 7
    %v407 = vsub.s32 7, %v406
    %v408 = vrot.slane %v373, %v407
    %v409 = vlaneseq
    %v410 = vshrl.u32 %v409, 7
    %v411 = vsub.s32 0, %v410
    %v412 = vrot.slane %v374, %v411
    %v413 = vlaneseq
    %v414 = vshrl.u32 %v413, 7
    %v415 = vsub.s32 1, %v414
    %v416 = vrot.slane %v374, %v415
    %v417 = vlaneseq
    %v418 = vshrl.u32 %v417, 7
    %v419 = vsub.s32 2, %v418
    %v420 = vrot.slane %v374, %v419
    %v421 = vlaneseq
    %v422 = vshrl.u32 %v421, 7
    %v423 = vsub.s32 3, %v422
    %v424 = vrot.slane %v374, %v423
    %v425 = vlaneseq
    %v426 = vshrl.u32 %v425, 7
    %v427 = vsub.s32 4, %v426
    %v428 = vrot.slane %v374, %v427
    %v429 = vlaneseq
    %v430 = vshrl.u32 %v429, 7
    %v431 = vsub.s32 5, %v430
    %v432 = vrot.slane %v374, %v431
    %v433 = vlaneseq
    %v434 = vshrl.u32 %v433, 7
    %v435 = vsub.s32 6, %v434
    %v436 = vrot.slane %v374, %v435
    %v437 = vlaneseq
    %v438 = vshrl.u32 %v437, 7
    %v439 = vsub.s32 7, %v438
    %v440 = vrot.slane %v374, %v439
    %v457 = vadd.f32 %v341, %v380
    %v458 = vadd.f32 %v342, %v384
    %v459 = vadd.f32 %v343, %v388
    %v460 = vadd.f32 %v344, %v392
    %v461 = vadd.f32 %v345, %v396
    %v462 = vadd.f32 %v346, %v400
    %v463 = vadd.f32 %v347, %v404
    %v464 = vadd.f32 %v348, %v408
    %v465 = vadd.f32 %v349, %v412
    %v466 = vadd.f32 %v350, %v416
    %v467 = vadd.f32 %v351, %v420
    %v468 = vadd.f32 %v352, %v424
    %v469 = vadd.f32 %v353, %v428
    %v470 = vadd.f32 %v354, %v432
    %v471 = vadd.f32 %v355, %v436
    %v472 = vadd.f32 %v356, %v440
    %v473 = vadd.f32 %v357, %v380
    %v474 = vadd.f32 %v358, %v384
    %v475 = vadd.f32 %v359, %v388
    %v476 = vadd.f32 %v360, %v392
    %v477 = vadd.f32 %v361, %v396
    %v478 = vadd.f32 %v362, %v400
    %v479 = vadd.f32 %v363, %v404
    %v480 = vadd.f32 %v364, %v408
    %v481 = vadd.f32 %v365, %v412
    %v482 = vadd.f32 %v366, %v416
    %v483 = vadd.f32 %v367, %v420
    %v484 = vadd.f32 %v368, %v424
    %v485 = vadd.f32 %v369, %v428
    %v486 = vadd.f32 %v370, %v432
    %v487 = vadd.f32 %v371, %v436
    %v488 = vadd.f32 %v372, %v440
    %489 = vst [vmem:[#allocation8] sm:$0xff] %v457
    %490 = vst [vmem:[#allocation8 + $0x8] sm:$0xff] %v458
    %491 = vst [vmem:[#allocation8 + $0x10] sm:$0xff] %v459
    %492 = vst [vmem:[#allocation8 + $0x18] sm:$0xff] %v460
    %493 = vst [vmem:[#allocation8 + $0x20] sm:$0xff] %v461
    %494 = vst [vmem:[#allocation8 + $0x28] sm:$0xff] %v462
    %495 = vst [vmem:[#allocation8 + $0x30] sm:$0xff] %v463
    %496 = vst [vmem:[#allocation8 + $0x38] sm:$0xff] %v464
    %497 = vst [vmem:[#allocation8 + $0x40] sm:$0xff] %v465
    %498 = vst [vmem:[#allocation8 + $0x48] sm:$0xff] %v466
    %499 = vst [vmem:[#allocation8 + $0x50] sm:$0xff] %v467
    %500 = vst [vmem:[#allocation8 + $0x58] sm:$0xff] %v468
    %501 = vst [vmem:[#allocation8 + $0x60] sm:$0xff] %v469
    %502 = vst [vmem:[#allocation8 + $0x68] sm:$0xff] %v470
    %503 = vst [vmem:[#allocation8 + $0x70] sm:$0xff] %v471
    %504 = vst [vmem:[#allocation8 + $0x78] sm:$0xff] %v472
    %505 = vst [vmem:[#allocation8 + $0x80] sm:$0xff] %v473
    %506 = vst [vmem:[#allocation8 + $0x88] sm:$0xff] %v474
    %507 = vst [vmem:[#allocation8 + $0x90] sm:$0xff] %v475
    %508 = vst [vmem:[#allocation8 + $0x98] sm:$0xff] %v476
    %509 = vst [vmem:[#allocation8 + $0xa0] sm:$0xff] %v477
    %510 = vst [vmem:[#allocation8 + $0xa8] sm:$0xff] %v478
    %511 = vst [vmem:[#allocation8 + $0xb0] sm:$0xff] %v479
    %512 = vst [vmem:[#allocation8 + $0xb8] sm:$0xff] %v480
    %513 = vst [vmem:[#allocation8 + $0xc0] sm:$0xff] %v481
    %514 = vst [vmem:[#allocation8 + $0xc8] sm:$0xff] %v482
    %515 = vst [vmem:[#allocation8 + $0xd0] sm:$0xff] %v483
    %516 = vst [vmem:[#allocation8 + $0xd8] sm:$0xff] %v484
    %517 = vst [vmem:[#allocation8 + $0xe0] sm:$0xff] %v485
    %518 = vst [vmem:[#allocation8 + $0xe8] sm:$0xff] %v486
    %519 = vst [vmem:[#allocation8 + $0xf0] sm:$0xff] %v487
    %520 = vst [vmem:[#allocation8 + $0xf8] sm:$0xff] %v488
    // Predicated region
    $region26: #{tpu_custom_call.1} parent=1 // pred_check
      _
    $region27: #{tpu_custom_call.1} parent=1 // pred_check_branch
      %522 = sbr.rel (0) target = $region29
    $region28: #{tpu_custom_call.1} parent=1 // pred_region
      %s524 = ssub.s32 4096, 4096
      %525 = vsyncadd [#allocation4], %s524
      %s526 = sshll.u32 [#allocation8], 4
      %s527 = int_to_ptr.vmem [resolvable:$true] %s526
      %532 = dma.vmem_to_hbm [thread:$0]  %s527, 4096, %s3, [#allocation4], 2048, 2048, 128
    $region29: #{tpu_custom_call.1} parent=1 // pred_fallthru
      _
    // Predicated region
    $region30: #{tpu_custom_call.1} parent=1 // pred_check
      _
    $region31: #{tpu_custom_call.1} parent=1 // pred_check_branch
      %534 = sbr.rel (0) target = $region33
    $region32: #{tpu_custom_call.1} parent=1 // pred_region
      %535 = dma.done [#allocation4], 4096
    $region33: #{tpu_custom_call.1} parent=1 // pred_fallthru
      _
    %536 = vsyncpa [#allocation3], 1
    %537 = vsyncpa [#allocation6], 1
    %538 = vsyncpa [#allocation4], 1

</llo_original>
